<compile_context>
chip_gen: v7x
topology: tpu7x:2x2x1
jax: 0.10.0
libtpu: 0.0.40
codegen_flags: <defaults>
</compile_context>

<pallas_src>
import functools
import math

import jax
import jax.numpy as jnp
from jax.experimental import pallas as pl
from jax.experimental.pallas import tpu as pltpu


LANE = 128


def _round_up(x, m):
    return ((x + m - 1) // m) * m


def _tpu_vmem_capacity():
    """Physical VMEM per TensorCore in bytes (conservative fallback)."""
    try:
        info = pltpu.get_tpu_info()
        cap = getattr(info, "vmem_capacity_bytes", None)
        if cap:
            return int(cap)
    except Exception:
        pass
    return 64 * 1024 * 1024  # v7x per-TC size: safe lower bound everywhere


def _vmem_limit_bytes():
    # ~75% of physical, capped: 48 MiB on v7x (64 MiB/TC), 96 MiB on v5e/v6e.
    return min(_tpu_vmem_capacity() * 3 // 4, 100 * 1024 * 1024)


# ----------------------------------------------------------------------------
# Kernel 1: row-tiled fused linear layer  y = x @ W + b   (lane-dense Nout)
# ----------------------------------------------------------------------------
def _linear_kernel(x_ref, w_ref, b_ref, o_ref):
    acc = jnp.dot(x_ref[...], w_ref[...], preferred_element_type=jnp.float32)
    o_ref[...] = (acc + b_ref[...]).astype(o_ref.dtype)


def linear_pallas(x, w, b, *, row_tile=1024, out_dtype=jnp.float32):
    """x: (M, K), w: (K, Nout), b: (1, Nout); Nout must be a multiple of 128.

    K is tiny for this module, so these are mem-bound: big row tiles amortize
    per-grid-step overhead; the grid axis is "parallel" for megacore / 2-TC.
    """
    M, K = x.shape
    Nout = w.shape[1]
    assert Nout % LANE == 0
    tm = min(row_tile, _round_up(M, 8))
    Mp = _round_up(M, tm)
    if Mp != M:
        x = jnp.pad(x, ((0, Mp - M), (0, 0)))
    out = pl.pallas_call(
        _linear_kernel,
        out_shape=jax.ShapeDtypeStruct((Mp, Nout), out_dtype),
        grid=(Mp // tm,),
        in_specs=[
            pl.BlockSpec((tm, K), lambda i: (i, 0)),
            pl.BlockSpec((K, Nout), lambda i: (0, 0)),
            pl.BlockSpec((1, Nout), lambda i: (0, 0)),
        ],
        out_specs=pl.BlockSpec((tm, Nout), lambda i: (i, 0)),
        compiler_params=pltpu.CompilerParams(
            dimension_semantics=("parallel",),
            vmem_limit_bytes=_vmem_limit_bytes(),
        ),
    )(x, w, b)
    return out[:M]


# ----------------------------------------------------------------------------
# Kernel 2: fused graph attention propagation, tiled over edge blocks.
#   - src/dst are lane-dense (1, Eblk) int32 rows; two (N, Eblk) bf16 one-hot
#     incidence tiles are built in-kernel (no O(E*N) HBM arrays).
#   - K|V packed gather (256 lanes), m|score packed scatter (256 lanes),
#     all big matmuls bf16 with f32 accumulation.
#   - wV accumulates in the resident output block; z in VMEM scratch;
#     normalization happens once at the last edge block (P3 pattern).
# ----------------------------------------------------------------------------
def _attn_kernel(src_ref, dst_ref, kvq_ref, pf_ref, bmat_ref,
                 hout_ref, z_acc, *, inv_sqrt_d):
    eb = pl.program_id(0)

    @pl.when(eb == 0)
    def _init():
        hout_ref[...] = jnp.zeros_like(hout_ref)
        z_acc[...] = jnp.zeros_like(z_acc)

    n_nodes = kvq_ref.shape[0]
    hdp = hout_ref.shape[1]
    e_blk = src_ref.shape[1]

    src_row = src_ref[...]            # (1, Eblk) int32
    dst_row = dst_ref[...]            # (1, Eblk) int32

    # (N, Eblk) one-hot incidence tiles, built directly in bf16 from indices.
    # NOTE: padded edges carry the sentinel index == N (out of range), so
    # their one-hot columns are all-zero -> they gather zeros and scatter
    # nothing.  Do not change the pad value without revisiting this.
    node_iota = jax.lax.broadcasted_iota(jnp.int32, (n_nodes, e_blk), 0)
    src_oh = (node_iota == src_row).astype(jnp.bfloat16)   # (N, Eblk)
    dst_oh = (node_iota == dst_row).astype(jnp.bfloat16)   # (N, Eblk)

    # resident bf16 node features: packed K|V (2*HDp wide) and Q (HDp wide)
    kvf = kvq_ref[:, : 2 * hdp]       # (N, 2*HDp) bf16
    qf = kvq_ref[:, 2 * hdp:]         # (N,   HDp) bf16

    # gathers: contract the node axis (dim 0 of both operands), bf16 MXU,
    # f32 accumulation.  One 256-lane-wide matmul fetches K and V together.
    dn = (((0,), (0,)), ((), ()))
    kv_src = jax.lax.dot_general(src_oh, kvf, dn,
                                 preferred_element_type=jnp.float32)
    q_dst = jax.lax.dot_general(dst_oh, qf, dn,
                                preferred_element_type=jnp.float32)
    k_src = kv_src[:, :hdp]
    v_src = kv_src[:, hdp:]

    # score = (K_src * Q_dst) / sqrt(D) * proj_e                (Eblk, HDp)
    prod = k_src * q_dst * inv_sqrt_d * pf_ref[...]

    # per-head sum over D, already broadcast back over D (block-diag matmul)
    raw = jnp.dot(prod, bmat_ref[...], preferred_element_type=jnp.float32)
    score = jnp.exp(jnp.clip(raw, -5.0, 5.0))                  # (Eblk, HDp)

    m = v_src * score                                          # (Eblk, HDp)

    # scatter-add m and score to destination nodes in one 256-wide bf16 matmul
    m_score = jnp.concatenate([m, score], axis=1).astype(jnp.bfloat16)
    scat = jnp.dot(dst_oh, m_score, preferred_element_type=jnp.float32)
    hout_ref[...] += scat[:, :hdp]    # wV accumulates in the resident output
    z_acc[...] += scat[:, hdp:]

    @pl.when(eb == pl.num_programs(0) - 1)
    def _final():
        hout_ref[...] = hout_ref[...] / (z_acc[...] + 1e-6)


def attention_pallas(kvq, pf, src, dst, bmat, out_dim, *, edge_tile=None):
    """kvq: (N, 3*HDp) bf16 packed [K|V|Q]; pf: (E, HDp) f32 proj_e;
    src/dst: (E,) int node indices; bmat: (HDp, HDp) head-sum matrix."""
    N = kvq.shape[0]
    E = src.shape[0]
    HDp = pf.shape[1]
    assert kvq.shape[1] == 3 * HDp and HDp % LANE == 0

    vmem_cap = _tpu_vmem_capacity()
    if edge_tile is None:
        # bigger blocks on 128 MiB chips (v5e/v6e), conservative on v7x
        edge_tile = 1024 if vmem_cap >= 96 * 1024 * 1024 else 512

    # pad the edge list to a multiple of the edge tile; padded edges point at
    # the out-of-range sentinel index N so they contribute nothing (see kernel).
    Ep = _round_up(max(E, 1), LANE)
    e_blk = min(edge_tile, Ep)
    Ep = _round_up(Ep, e_blk)
    pad = Ep - E
    src_p = jnp.pad(src.astype(jnp.int32), (0, pad), constant_values=N)[None, :]
    dst_p = jnp.pad(dst.astype(jnp.int32), (0, pad), constant_values=N)[None, :]
    pf_p = jnp.pad(pf, ((0, pad), (0, 0)))

    kernel = functools.partial(_attn_kernel, inv_sqrt_d=1.0 / math.sqrt(out_dim))
    hout = pl.pallas_call(
        kernel,
        out_shape=jax.ShapeDtypeStruct((N, HDp), jnp.float32),
        grid=(Ep // e_blk,),
        in_specs=[
            pl.BlockSpec((1, e_blk), lambda i: (0, i)),        # src idx (lane-dense)
            pl.BlockSpec((1, e_blk), lambda i: (0, i)),        # dst idx (lane-dense)
            pl.BlockSpec((N, 3 * HDp), lambda i: (0, 0)),      # K|V|Q (resident, bf16)
            pl.BlockSpec((e_blk, HDp), lambda i: (i, 0)),      # proj_e tile (f32)
            pl.BlockSpec((HDp, HDp), lambda i: (0, 0)),        # head-sum matrix
        ],
        out_specs=pl.BlockSpec((N, HDp), lambda i: (0, 0)),    # resident wV/h_out
        scratch_shapes=[
            pltpu.VMEM((N, HDp), jnp.float32),                 # z accumulator
        ],
        compiler_params=pltpu.CompilerParams(
            dimension_semantics=("arbitrary",),
            vmem_limit_bytes=min(vmem_cap * 3 // 4, 100 * 1024 * 1024),
        ),
    )(src_p, dst_p, kvq, pf_p, bmat)
    return hout
    # TODO(synk): on v7x (2 TCs) add a leading "parallel" axis over head-aligned
    # column blocks once HDp > 128, and tile N when (N, HDp) exceeds VMEM.


# ----------------------------------------------------------------------------
# Module wrapper (parameter setup + glue padding / reshapes in plain JAX)
# ----------------------------------------------------------------------------
def init_params(key, in_dim, out_dim, num_heads, in_edge_dim, use_bias=True):
    hd = out_dim * num_heads
    ks = jax.random.split(key, 8)

    def lin(kw, kb, fan_in, fan_out):
        bound = 1.0 / math.sqrt(fan_in)
        w = jax.random.uniform(kw, (fan_in, fan_out), jnp.float32, -bound, bound)
        if use_bias:
            b = jax.random.uniform(kb, (1, fan_out), jnp.float32, -bound, bound)
        else:
            b = jnp.zeros((1, fan_out), jnp.float32)
        return w, b

    return {
        "Q": lin(ks[0], ks[1], in_dim, hd),
        "K": lin(ks[2], ks[3], in_dim, hd),
        "V": lin(ks[4], ks[5], in_dim, hd),
        "proj_e": lin(ks[6], ks[7], in_edge_dim, hd),
    }


def _head_sum_matrix(num_heads, out_dim, hdp):
    """Block-diagonal (hdp, hdp) matrix: B[i, j] = 1 iff i, j are real feature
    columns belonging to the same head.  prod @ B gives the per-head sum over
    D already broadcast back over D (padded columns produce 0)."""
    hd = num_heads * out_dim
    idx = jnp.arange(hdp)
    head = idx // out_dim
    valid = idx < hd
    same = (head[:, None] == head[None, :]) & valid[:, None] & valid[None, :]
    return same.astype(jnp.float32)


def multi_head_attention_forward(params, h, e, src, dst, num_heads, out_dim):
    N, E = h.shape[0], e.shape[0]
    H, D = num_heads, out_dim
    HD = H * D
    HDp = _round_up(HD, LANE)      # lane-dense feature width

    h = h.astype(jnp.float32)
    e = e.astype(jnp.float32)

    def pad_cols(w, b):
        return (jnp.pad(w, ((0, 0), (0, HDp - HD))),
                jnp.pad(b, ((0, 0), (0, HDp - HD))))

    wq, bq = pad_cols(*params["Q"])
    wk, bk = pad_cols(*params["K"])
    wv, bv = pad_cols(*params["V"])
    wp, bp = pad_cols(*params["proj_e"])

    # fused K|V|Q projection: h is read from HBM once; output is bf16 and is
    # fed straight to the attention kernel (K|V packed = first 2*HDp columns,
    # Q = last HDp columns -> no host-side slicing between the two kernels).
    w_kvq = jnp.concatenate([wk, wv, wq], axis=1)     # (in_dim, 3*HDp)
    b_kvq = jnp.concatenate([bk, bv, bq], axis=1)     # (1, 3*HDp)
    kvq = linear_pallas(h, w_kvq, b_kvq, out_dtype=jnp.bfloat16)  # (N, 3*HDp)

    Pf = linear_pallas(e, wp, bp)                     # (E, HDp) f32

    bmat = _head_sum_matrix(H, D, HDp)                # (HDp, HDp)

    hout = attention_pallas(kvq, Pf, src, dst, bmat, D)

    h_out = hout[:, :HD].reshape(N, H, D)
    e_out = Pf[:, :HD].reshape(E, H, D)               # out_edge_features('proj_e')
    return h_out, e_out


# ----------------------------------------------------------------------------
# Pure-JAX reference (for correctness check)
# ----------------------------------------------------------------------------
def reference_forward(params, h, e, src, dst, num_heads, out_dim):
    N, E, H, D = h.shape[0], e.shape[0], num_heads, out_dim
    Qf = h @ params["Q"][0] + params["Q"][1]
    Kf = h @ params["K"][0] + params["K"][1]
    Vf = h @ params["V"][0] + params["V"][1]
    Pf = e @ params["proj_e"][0] + params["proj_e"][1]
    Qh = Qf.reshape(N, H, D)
    Kh = Kf.reshape(N, H, D)
    Vh = Vf.reshape(N, H, D)
    Pe = Pf.reshape(E, H, D)
    score = Kh[src] * Qh[dst] / math.sqrt(D)
    score = score * Pe
    e_out = Pe
    s = jnp.exp(jnp.clip(score.sum(-1, keepdims=True), -5.0, 5.0))  # (E, H, 1)
    m = Vh[src] * s
    wV = jax.ops.segment_sum(m, dst, num_segments=N)
    z = jax.ops.segment_sum(s, dst, num_segments=N)
    h_out = wV / (z + 1e-6)
    return h_out, e_out


# ----------------------------------------------------------------------------
if __name__ == "__main__":
    in_dim = 16
    in_edge_dim = 16
    out_dim = 8
    num_heads = 4
    N = 8   # nodes
    # deterministic small graph: self loops + ring  -> E = 16 edges
    src = jnp.concatenate([jnp.arange(N), jnp.arange(N)]).astype(jnp.int32)
    dst = jnp.concatenate([jnp.arange(N), (jnp.arange(N) + 1) % N]).astype(jnp.int32)
    E = src.shape[0]

    key = jax.random.PRNGKey(0)
    kp, kh, ke = jax.random.split(key, 3)
    params = init_params(kp, in_dim, out_dim, num_heads, in_edge_dim, use_bias=True)
    h = jax.random.normal(kh, (N, in_dim), dtype=jnp.float32)
    e = jax.random.normal(ke, (E, in_edge_dim), dtype=jnp.float32)

    h_out, e_out = multi_head_attention_forward(
        params, h, e, src, dst, num_heads, out_dim
    )
    jax.block_until_ready((h_out, e_out))

    h_ref, e_ref = reference_forward(params, h, e, src, dst, num_heads, out_dim)
    assert h_out.shape == (N, num_heads, out_dim)
    assert e_out.shape == (E, num_heads, out_dim)
    # node features go through bf16 gathers/scatters -> looser tolerance;
    # proj_e (e_out) stays f32 end-to-end -> tight tolerance.
    assert jnp.allclose(h_out, h_ref, atol=2e-2, rtol=2e-2)
    assert jnp.allclose(e_out, e_ref, atol=1e-4, rtol=1e-4)

    print("KERNEL_OK")
</pallas_src>

<mosaic_0001>
module attributes {stable_mosaic.version = 11 : i64} {
  func.func @_linear_kernel(%arg0: i32, %arg1: memref<8x16xf32, #tpu.memory_space<vmem>>, %arg2: memref<16x384xf32, #tpu.memory_space<vmem>>, %arg3: memref<1x384xf32, #tpu.memory_space<vmem>>, %arg4: memref<8x384xbf16, #tpu.memory_space<vmem>>) attributes {dimension_semantics = [#tpu.dimension_semantics<parallel>], iteration_bounds = array<i64: 1>, scalar_prefetch = 0 : i64, scratch_operands = 0 : i64, tpu.core_type = #tpu.core_type<tc>, window_params = [{transform_indices = @transform_0, window_bounds = array<i64: 8, 16>}, {pipeline_mode = #tpu.pipeline_mode<synchronous>, transform_indices = @transform_1, window_bounds = array<i64: 16, 384>}, {pipeline_mode = #tpu.pipeline_mode<synchronous>, transform_indices = @transform_2, window_bounds = array<i64: 1, 384>}, {transform_indices = @transform_3, window_bounds = array<i64: 8, 384>}]} {
    %c0 = arith.constant 0 : index
    %c0_0 = arith.constant 0 : index
    %0 = vector.load %arg1[%c0, %c0_0] : memref<8x16xf32, #tpu.memory_space<vmem>>, vector<8x16xf32>
    %c0_1 = arith.constant 0 : index
    %c0_2 = arith.constant 0 : index
    %1 = vector.load %arg2[%c0_1, %c0_2] : memref<16x384xf32, #tpu.memory_space<vmem>>, vector<16x384xf32>
    %cst = arith.constant dense<0.000000e+00> : vector<8x384xf32>
    %2 = tpu.matmul %0, %1, %cst {dimension_numbers = #tpu.dot_dimension_numbers<[1], [0], [0], [1], [0, 0, 1, 1], [], []>} : vector<8x16xf32>, vector<16x384xf32>, vector<8x384xf32> -> vector<8x384xf32>
    %c0_3 = arith.constant 0 : index
    %c0_4 = arith.constant 0 : index
    %3 = vector.load %arg3[%c0_3, %c0_4] : memref<1x384xf32, #tpu.memory_space<vmem>>, vector<1x384xf32>
    %4 = vector.broadcast %3 : vector<1x384xf32> to vector<8x384xf32>
    %5 = arith.addf %2, %4 : vector<8x384xf32>
    %6 = arith.truncf %5 : vector<8x384xf32> to vector<8x384xbf16>
    %c0_5 = arith.constant 0 : index
    %c0_6 = arith.constant 0 : index
    %7 = vector.load %arg4[%c0_5, %c0_6] : memref<8x384xbf16, #tpu.memory_space<vmem>>, vector<8x384xbf16>
    tpu.vector_store %arg4[%c0_5, %c0_6], %6 {strides = array<i32>} : memref<8x384xbf16, #tpu.memory_space<vmem>>, vector<8x384xbf16>,
    return
  }
  func.func @transform_0(%arg0: i32) -> (i32, i32) {
    %c0_i32 = arith.constant 0 : i32
    %c0_i32_0 = arith.constant 0 : i32
    return %arg0, %c0_i32 : i32, i32
  }
  func.func @transform_1(%arg0: i32) -> (i32, i32) {
    %c0_i32 = arith.constant 0 : i32
    %c0_i32_0 = arith.constant 0 : i32
    %c0_i32_1 = arith.constant 0 : i32
    return %c0_i32, %c0_i32_0 : i32, i32
  }
  func.func @transform_2(%arg0: i32) -> (i32, i32) {
    %c0_i32 = arith.constant 0 : i32
    %c0_i32_0 = arith.constant 0 : i32
    %c0_i32_1 = arith.constant 0 : i32
    return %c0_i32, %c0_i32_0 : i32, i32
  }
  func.func @transform_3(%arg0: i32) -> (i32, i32) {
    %c0_i32 = arith.constant 0 : i32
    %c0_i32_0 = arith.constant 0 : i32
    return %arg0, %c0_i32 : i32, i32
  }
}

</mosaic_0001>

<llo_original>
// kernel: tpu_custom_call.1
$region0: #{tpu_custom_call.1}
  #allocation0 [shape = 'u32[]', space=smem, size = 0x4, offset = 0x4, fixed_abs, tag = 'smem constant byte address 0x4 - core index']
  #allocation1 [shape = 'u32[144,128]{1,0:T(1,128)}', space=vmem, size = 0x12000, scoped, tag = 'internal scratch']
  %s0 = inlined_call_operand.hbm [shape: f32[8,16], index: 0, kind: input, shape index: {}]
  %s1 = inlined_call_operand.hbm [shape: f32[16,384], index: 1, kind: input, shape index: {}]
  %s2 = inlined_call_operand.vmem [shape: f32[1,384], index: 2, kind: input, shape index: {}]
  %s3 = inlined_call_operand.hbm [shape: bf16[8,384], index: 3, kind: output, shape index: {}]
  %s4 = sld [smem:[#allocation0]]
  $region30: #{tpu_custom_call.1} parent=0
    _
  %s6 = ssub.s32 1, %s4
  %s7 = scalar_select 0, %s6, %s4
  $region1: #{tpu_custom_call.1} parent=0
    #allocation2 [shape = 'u8[4096]{0}', space=vmem, size = 0x1000, scoped, tag = 'input window, operand 0, single buffered']
    #allocation3 [shape = 's32[1]{0}', space=sflag, size = 0x4, scoped, tag = 'scoped memory for tpu_custom_call.1']
    #allocation4 [shape = 's32[1]{0}', space=sflag, size = 0x4, scoped, tag = 'scoped memory for tpu_custom_call.1']
    #allocation5 [shape = 'u8[24576]{0}', space=vmem, size = 0x6000, scoped, tag = 'input window, operand 1, single buffered']
    #allocation6 [shape = 's32[1]{0}', space=sflag, size = 0x4, scoped, tag = 'scoped memory for tpu_custom_call.1']
    #allocation7 [shape = 'u8[6144]{0}', space=vmem, size = 0x1800, scoped, tag = 'output window, operand 0, single buffered']
    %8 = vsyncpa [#allocation3], 0
    %9 = vsyncpa [#allocation6], 0
    %10 = vsyncpa [#allocation4], 0
    // Predicated region
    $region2: #{tpu_custom_call.1} parent=1 // pred_check
      _
    $region3: #{tpu_custom_call.1} parent=1 // pred_check_branch
      %12 = sbr.rel (0) target = $region5
    $region4: #{tpu_custom_call.1} parent=1 // pred_region
      %s14 = ssub.s32 128, 128
      %15 = vsyncadd [#allocation3], %s14
      %s17 = sshll.u32 [#allocation2], 4
      %s18 = int_to_ptr.vmem [resolvable:$true] %s17
      %20 = dma.hbm_to_vmem [thread:$0]  %s0, 128, %s18, [#allocation3]
    $region5: #{tpu_custom_call.1} parent=1 // pred_fallthru
      _
    // Predicated region
    $region6: #{tpu_custom_call.1} parent=1 // pred_check
      _
    $region7: #{tpu_custom_call.1} parent=1 // pred_check_branch
      %22 = sbr.rel (0) target = $region9
    $region8: #{tpu_custom_call.1} parent=1 // pred_region
      %s24 = ssub.s32 768, 768
      %25 = vsyncadd [#allocation6], %s24
      %s26 = sshll.u32 [#allocation5], 4
      %s27 = int_to_ptr.vmem [resolvable:$true] %s26
      %32 = dma.hbm_to_vmem [thread:$0]  %s1, 768, %s27, [#allocation6], 384, 384, 24
    $region9: #{tpu_custom_call.1} parent=1 // pred_fallthru
      _
    // Predicated region
    $region10: #{tpu_custom_call.1} parent=1 // pred_check
      _
    $region11: #{tpu_custom_call.1} parent=1 // pred_check_branch
      %34 = sbr.rel (0) target = $region13
    $region12: #{tpu_custom_call.1} parent=1 // pred_region
      _
    $region13: #{tpu_custom_call.1} parent=1 // pred_fallthru
      _
    // Predicated region
    $region14: #{tpu_custom_call.1} parent=1 // pred_check
      _
    $region15: #{tpu_custom_call.1} parent=1 // pred_check_branch
      %36 = sbr.rel (0) target = $region17
    $region16: #{tpu_custom_call.1} parent=1 // pred_region
      %37 = dma.done [#allocation3], 128
    $region17: #{tpu_custom_call.1} parent=1 // pred_fallthru
      _
    // Predicated region
    $region18: #{tpu_custom_call.1} parent=1 // pred_check
      _
    $region19: #{tpu_custom_call.1} parent=1 // pred_check_branch
      %39 = sbr.rel (0) target = $region21
    $region20: #{tpu_custom_call.1} parent=1 // pred_region
      %40 = dma.done [#allocation6], 768
    $region21: #{tpu_custom_call.1} parent=1 // pred_fallthru
      _
    %v41 = vld [vmem:[#allocation2] sm:$0xff]
    %v42 = vld [vmem:[#allocation5] sm:$0xff]
    %v43 = vld [vmem:[#allocation5 + $0x8] sm:$0xff]
    %v44 = vld [vmem:[#allocation5 + $0x10] sm:$0xff]
    %v45 = vld [vmem:[#allocation5 + $0x18] sm:$0xff]
    %v46 = vld [vmem:[#allocation5 + $0x20] sm:$0xff]
    %v47 = vld [vmem:[#allocation5 + $0x28] sm:$0xff]
    %v48 = vld [vmem:[%s2] sm:$0x7]
    %v50 = vlaneseq
    %v51 = vshrl.u32 %v50, 7
    %v52 = vsub.s32 0, %v51
    %v53 = vrot.slane %v48, %v52
    %v54 = vlaneseq
    %v55 = vshrl.u32 %v54, 7
    %v56 = vsub.s32 1, %v55
    %v57 = vrot.slane %v48, %v56
    %v58 = vlaneseq
    %v59 = vshrl.u32 %v58, 7
    %v60 = vsub.s32 2, %v59
    %v61 = vrot.slane %v48, %v60
    %vm65 = vcmask 130048
    %v67 = vsel %vm65, %v41, 0
    %69 = vmatprep.subr.mxu0 %v43
    %70 = vmatpush1.msra.mxu0 %v42
    %71 = vmatprep.subr.mxu0 %v46
    %72 = vmatpush1.msra.mxu0 %v45
    %73 = vmatprep.subr.mxu0 0.0
    %74 = vmatpush1.msra.mxu0 0.0
    %75 = vmatprep.subr.mxu0 0.0
    %76 = vmatpush1.msra.mxu0 0.0
    %77 = vmatprep.subr.mxu0 0.0
    %78 = vmatpush1.msra.mxu0 0.0
    %79 = vmatprep.subr.mxu0 0.0
    %80 = vmatpush1.msra.mxu0 0.0
    %81 = vmatprep.subr.mxu0 0.0
    %82 = vmatpush1.msra.mxu0 0.0
    %83 = vmatprep.subr.mxu0 0.0
    %84 = vmatpush1.msra.mxu0 0.0
    %85 = vmatprep.subr.mxu0 0.0
    %86 = vmatpush1.msra.mxu0 0.0
    %87 = vmatprep.subr.mxu0 0.0
    %88 = vmatpush1.msra.mxu0 0.0
    %89 = vmatprep.subr.mxu0 0.0
    %90 = vmatpush1.msra.mxu0 0.0
    %91 = vmatprep.subr.mxu0 0.0
    %92 = vmatpush1.msra.mxu0 0.0
    %93 = vmatprep.subr.mxu0 0.0
    %94 = vmatpush1.msra.mxu0 0.0
    %95 = vmatprep.subr.mxu0 0.0
    %96 = vmatpush1.msra.mxu0 0.0
    %97 = vmatprep.subr.mxu0 0.0
    %98 = vmatpush1.msra.mxu0 0.0
    %99 = vmatprep.subr.mxu0 0.0
    %100 = vmatpush1.msra.mxu0 0.0
    %101 = vmatprep.subr.mxu0 0.0
    %102 = vmatpush1.msra.mxu0 0.0
    %103 = vmatprep.subr.mxu0 0.0
    %104 = vmatpush1.msra.mxu0 0.0
    %105 = vmatprep.subr.mxu0 0.0
    %106 = vmatpush1.msra.mxu0 0.0
    %107 = vmatprep.subr.mxu0 0.0
    %108 = vmatpush1.msra.mxu0 0.0
    %109 = vmatprep.subr.mxu0 0.0
    %110 = vmatpush1.msra.mxu0 0.0
    %111 = vmatprep.subr.mxu0 0.0
    %112 = vmatpush1.msra.mxu0 0.0
    %113 = vmatprep.subr.mxu0 0.0
    %114 = vmatpush1.msra.mxu0 0.0
    %115 = vmatprep.subr.mxu0 0.0
    %116 = vmatpush1.msra.mxu0 0.0
    %117 = vmatprep.subr.mxu0 0.0
    %118 = vmatpush1.msra.mxu0 0.0
    %119 = vmatprep.subr.mxu0 0.0
    %120 = vmatpush1.msra.mxu0 0.0
    %121 = vmatprep.subr.mxu0 0.0
    %122 = vmatpush1.msra.mxu0 0.0
    %123 = vmatprep.subr.mxu0 0.0
    %124 = vmatpush1.msra.mxu0 0.0
    %125 = vmatprep.subr.mxu0 0.0
    %126 = vmatpush1.msra.mxu0 0.0
    %127 = vmatprep.subr.mxu0 0.0
    %128 = vmatpush1.msra.mxu0 0.0
    %129 = vmatprep.subr.mxu0 0.0
    %130 = vmatpush1.msra.mxu0 0.0
    %131 = vmatprep.subr.mxu0 0.0
    %132 = vmatpush1.msra.mxu0 0.0
    %133 = vmatprep.mubr.f32.mxu0 0.0
    %134 = vmatmul.mubr.f32.gmra.mrb[0].mxu0 %v67
    %v135 = vpop.f32.mrb[0].mxu0
    %v136 = vadd.f32 %v53, %v135
    %v137 = vpop.f32.mrb[0].mxu0
    %v138 = vadd.f32 %v57, %v137
    %139 = vdwg.mxu0
    %140 = vmatprep.subr.mxu0 0.0
    %141 = vmatpush1.msra.mxu0 %v44
    %142 = vmatprep.subr.mxu0 0.0
    %143 = vmatpush1.msra.mxu0 %v47
    %144 = vmatprep.subr.mxu0 0.0
    %145 = vmatpush1.msra.mxu0 0.0
    %146 = vmatprep.subr.mxu0 0.0
    %147 = vmatpush1.msra.mxu0 0.0
    %148 = vmatprep.subr.mxu0 0.0
    %149 = vmatpush1.msra.mxu0 0.0
    %150 = vmatprep.subr.mxu0 0.0
    %151 = vmatpush1.msra.mxu0 0.0
    %152 = vmatprep.subr.mxu0 0.0
    %153 = vmatpush1.msra.mxu0 0.0
    %154 = vmatprep.subr.mxu0 0.0
    %155 = vmatpush1.msra.mxu0 0.0
    %156 = vmatprep.subr.mxu0 0.0
    %157 = vmatpush1.msra.mxu0 0.0
    %158 = vmatprep.subr.mxu0 0.0
    %159 = vmatpush1.msra.mxu0 0.0
    %160 = vmatprep.subr.mxu0 0.0
    %161 = vmatpush1.msra.mxu0 0.0
    %162 = vmatprep.subr.mxu0 0.0
    %163 = vmatpush1.msra.mxu0 0.0
    %164 = vmatprep.subr.mxu0 0.0
    %165 = vmatpush1.msra.mxu0 0.0
    %166 = vmatprep.subr.mxu0 0.0
    %167 = vmatpush1.msra.mxu0 0.0
    %168 = vmatprep.subr.mxu0 0.0
    %169 = vmatpush1.msra.mxu0 0.0
    %170 = vmatprep.subr.mxu0 0.0
    %171 = vmatpush1.msra.mxu0 0.0
    %172 = vmatprep.subr.mxu0 0.0
    %173 = vmatpush1.msra.mxu0 0.0
    %174 = vmatprep.subr.mxu0 0.0
    %175 = vmatpush1.msra.mxu0 0.0
    %176 = vmatprep.subr.mxu0 0.0
    %177 = vmatpush1.msra.mxu0 0.0
    %178 = vmatprep.subr.mxu0 0.0
    %179 = vmatpush1.msra.mxu0 0.0
    %180 = vmatprep.subr.mxu0 0.0
    %181 = vmatpush1.msra.mxu0 0.0
    %182 = vmatprep.subr.mxu0 0.0
    %183 = vmatpush1.msra.mxu0 0.0
    %184 = vmatprep.subr.mxu0 0.0
    %185 = vmatpush1.msra.mxu0 0.0
    %186 = vmatprep.subr.mxu0 0.0
    %187 = vmatpush1.msra.mxu0 0.0
    %188 = vmatprep.subr.mxu0 0.0
    %189 = vmatpush1.msra.mxu0 0.0
    %190 = vmatprep.subr.mxu0 0.0
    %191 = vmatpush1.msra.mxu0 0.0
    %192 = vmatprep.subr.mxu0 0.0
    %193 = vmatpush1.msra.mxu0 0.0
    %194 = vmatprep.subr.mxu0 0.0
    %195 = vmatpush1.msra.mxu0 0.0
    %196 = vmatprep.subr.mxu0 0.0
    %197 = vmatpush1.msra.mxu0 0.0
    %198 = vmatprep.subr.mxu0 0.0
    %199 = vmatpush1.msra.mxu0 0.0
    %200 = vmatprep.subr.mxu0 0.0
    %201 = vmatpush1.msra.mxu0 0.0
    %202 = vmatprep.subr.mxu0 0.0
    %203 = vmatpush1.msra.mxu0 0.0
    %204 = vmatprep.mubr.f32.mxu0 0.0
    %205 = vmatmul.mubr.f32.gmra.mrb[0].mxu0 %v67
    %v206 = vpop.f32.mrb[0].mxu0
    %v207 = vadd.f32 %v61, %v206
    %v208 = vpop.f32.mrb[0].mxu0
    %209 = vdwg.mxu0
    %v210 = vpack.c.bf16 %v136, %v136
    %v211 = vpack.c.bf16 %v138, %v138
    %v212 = vpack.c.bf16 %v207, %v207
    %v216 = vunpack.c.l.b16 %v210
    %v217 = vunpack.c.l.b16 %v211
    %v218 = vunpack.c.l.b16 %v212
    %v219 = vpack.c.b16 %v217, %v216
    %v220 = vpack.c.b16 %v218, %v218
    %223 = vst [vmem:[#allocation7] sm:$0xff] %v219
    %224 = vst [vmem:[#allocation7 + $0x8] sm:$0xf] %v220
    // Predicated region
    $region22: #{tpu_custom_call.1} parent=1 // pred_check
      _
    $region23: #{tpu_custom_call.1} parent=1 // pred_check_branch
      %226 = sbr.rel (0) target = $region25
    $region24: #{tpu_custom_call.1} parent=1 // pred_region
      %s228 = ssub.s32 192, 192
      %229 = vsyncadd [#allocation4], %s228
      %s231 = sshll.u32 [#allocation7], 4
      %s232 = int_to_ptr.vmem [resolvable:$true] %s231
      %234 = dma.vmem_to_hbm [thread:$0]  %s232, 192, %s3, [#allocation4]
    $region25: #{tpu_custom_call.1} parent=1 // pred_fallthru
      _
    // Predicated region
    $region26: #{tpu_custom_call.1} parent=1 // pred_check
      _
    $region27: #{tpu_custom_call.1} parent=1 // pred_check_branch
      %236 = sbr.rel (0) target = $region29
    $region28: #{tpu_custom_call.1} parent=1 // pred_region
      %237 = dma.done [#allocation4], 192
    $region29: #{tpu_custom_call.1} parent=1 // pred_fallthru
      _
    %238 = vsyncpa [#allocation3], 1
    %239 = vsyncpa [#allocation6], 1
    %240 = vsyncpa [#allocation4], 1

</llo_original>
